<compile_context>
chip_gen: v7x
topology: tpu7x:2x2x1
jax: 0.10.0
libtpu: 0.0.40
codegen_flags: <defaults>
</compile_context>

<pallas_src>
import functools

import jax
import jax.numpy as jnp
from jax.experimental import pallas as pl
from jax.experimental.pallas import tpu as pltpu


def _lora_qkv_kernel(x_ref, wqkv_ref, bias_ref, aqv_ref, bq_ref, bv_ref, o_ref,
                     *, dim, rank):
    """Fused qkv + LoRA(q) + LoRA(v) for one tile of tokens.

    x_ref:    (tm, C)    compute dtype
    wqkv_ref: (C, 3C)    compute dtype (frozen base projection, pre-transposed)
    bias_ref: (1, 3C)    f32
    aqv_ref:  (C, 2r)    [A_q^T | A_v^T] fused LoRA-A
    bq_ref:   (r, C)     bv_ref: (r, C)
    o_ref:    (tm, 3C)   output dtype
    """
    x = x_ref[...]

    # Frozen qkv projection with f32 accumulation; bias added in f32.
    acc = jnp.dot(x, wqkv_ref[...], preferred_element_type=jnp.float32)
    acc = acc + bias_ref[...]

    # Fused LoRA-A: one (tm, C) @ (C, 2r) MXU pass covers both branches.
    a_all = jnp.dot(x, aqv_ref[...], preferred_element_type=jnp.float32)
    cdt = bq_ref.dtype
    dq = jnp.dot(a_all[:, :rank].astype(cdt), bq_ref[...],
                 preferred_element_type=jnp.float32)
    dv = jnp.dot(a_all[:, rank:].astype(cdt), bv_ref[...],
                 preferred_element_type=jnp.float32)

    # Static slice stores: q gets +dq, k untouched, v gets +dv.  For SAM's C
    # (multiple of 128) these are 128-lane-aligned full-vreg stores.
    o_ref[:, :dim] = (acc[:, :dim] + dq).astype(o_ref.dtype)
    o_ref[:, dim:2 * dim] = acc[:, dim:2 * dim].astype(o_ref.dtype)
    o_ref[:, 2 * dim:] = (acc[:, 2 * dim:] + dv).astype(o_ref.dtype)


def prepare_lora_qkv_weights(w_qkv, b_qkv, w_a_q, w_b_q, w_a_v, w_b_v, *,
                             compute_dtype=jnp.bfloat16):
    """Call ONCE at model-load time.

    PyTorch nn.Linear weight layout is (out_features, in_features); this
    returns the pre-transposed, compute-dtype operands the kernel expects so
    the per-call forward does no weight transpose / cast work.
    """
    cdt = jnp.dtype(compute_dtype)
    C = w_qkv.shape[1]
    wqkv_t = jnp.asarray(w_qkv).T.astype(cdt)                         # (C, 3C)
    bias2d = jnp.asarray(b_qkv).reshape(1, 3 * C).astype(jnp.float32)  # (1, 3C)
    a_qv_t = jnp.concatenate([jnp.asarray(w_a_q).T,
                              jnp.asarray(w_a_v).T], axis=1).astype(cdt)  # (C, 2r)
    bq_t = jnp.asarray(w_b_q).T.astype(cdt)                           # (r, C)
    bv_t = jnp.asarray(w_b_v).T.astype(cdt)                           # (r, C)
    return wqkv_t, bias2d, a_qv_t, bq_t, bv_t


@functools.lru_cache(maxsize=1)
def _vmem_ceiling_bytes():
    """Per-TensorCore VMEM ceiling, leaving headroom for Mosaic scratch."""
    phys = None
    try:
        phys = int(pltpu.get_tpu_info().vmem_capacity_bytes)
    except Exception:
        phys = None
    if not phys:
        kind = ""
        try:
            kind = jax.devices()[0].device_kind.lower()
        except Exception:
            pass
        phys = (64 << 20) if ("v7" in kind or "7x" in kind) else (128 << 20)
    # v7x (64 MiB/TC) -> ~56 MiB; v5e/v6e (128 MiB) -> ~100 MiB.
    return max(min(phys - (8 << 20), 100 << 20), 32 << 20)


@functools.partial(jax.jit, static_argnames=("tm", "out_dtype"))
def lora_qkv_forward(x, wqkv_t, bias2d, a_qv_t, bq_t, bv_t, *,
                     tm=None, out_dtype=None):
    """x: (B, H, W, C).  Weights must come from prepare_lora_qkv_weights().

    tm:        token-tile rows per grid step (None = auto: 512 where VMEM
               allows it (v5e/v6e), else 256 (v7x)).
    out_dtype: output dtype (None = x.dtype); bf16 halves the largest HBM
               stream if downstream consumers tolerate it.
    """
    B, H, W, C = x.shape
    r = bq_t.shape[0]
    M = B * H * W
    cdt = jnp.dtype(wqkv_t.dtype)
    odt = jnp.dtype(x.dtype if out_dtype is None else out_dtype)

    vmem_ceiling = _vmem_ceiling_bytes()
    if tm is None:
        tm = 512 if vmem_ceiling >= (96 << 20) else 256
    assert tm % 8 == 0, "tm must be a multiple of 8"

    # No pad / trailing slice: one exact block when M <= tm, otherwise a
    # cdiv-grid where Pallas masks the partial last tile's read/write.
    tm_eff = M if M <= tm else tm
    m_tiles = pl.cdiv(M, tm_eff)

    x2d = x.reshape(M, C).astype(cdt)

    # VMEM budget: double-buffered x/out streams, single-buffered resident
    # weights, in-kernel f32 intermediates (acc/dq/dv/a_all), plus headroom.
    csz = cdt.itemsize
    osz = odt.itemsize
    weights_b = (C * 3 * C * csz + 3 * C * 4
                 + C * 2 * r * csz + 2 * r * C * csz)
    streams_b = 2 * tm_eff * C * csz + 2 * tm_eff * 3 * C * osz
    temps_b = tm_eff * 3 * C * 4 + 2 * tm_eff * C * 4 + tm_eff * 2 * r * 4
    vmem_limit = int(min(max(weights_b + streams_b + temps_b + (4 << 20),
                             32 << 20), vmem_ceiling))
    # TODO(synk): for f32 compute at C>=1280 on v7x (64 MiB/TC), add an
    # N-tiling grid axis over the 3C columns (or fp8-quantize W_qkv^T).

    out2d = pl.pallas_call(
        functools.partial(_lora_qkv_kernel, dim=C, rank=r),
        out_shape=jax.ShapeDtypeStruct((M, 3 * C), odt),
        grid_spec=pltpu.PrefetchScalarGridSpec(
            num_scalar_prefetch=0,
            grid=(m_tiles,),
            in_specs=[
                pl.BlockSpec((tm_eff, C), lambda i: (i, 0)),        # x tile
                pl.BlockSpec((C, 3 * C), lambda i: (0, 0),          # W_qkv^T
                             pipeline_mode=pl.Buffered(1)),
                pl.BlockSpec((1, 3 * C), lambda i: (0, 0),          # bias
                             pipeline_mode=pl.Buffered(1)),
                pl.BlockSpec((C, 2 * r), lambda i: (0, 0),          # [A_q|A_v]^T
                             pipeline_mode=pl.Buffered(1)),
                pl.BlockSpec((r, C), lambda i: (0, 0),              # B_q^T
                             pipeline_mode=pl.Buffered(1)),
                pl.BlockSpec((r, C), lambda i: (0, 0),              # B_v^T
                             pipeline_mode=pl.Buffered(1)),
            ],
            out_specs=pl.BlockSpec((tm_eff, 3 * C), lambda i: (i, 0)),
        ),
        compiler_params=pltpu.CompilerParams(
            dimension_semantics=("parallel",),
            vmem_limit_bytes=vmem_limit),
    )(x2d, wqkv_t, bias2d, a_qv_t, bq_t, bv_t)

    return out2d.reshape(B, H, W, 3 * C)


def _reference(x, w_qkv, b_qkv, w_a_q, w_b_q, w_a_v, w_b_v):
    """Plain-JAX reference mirroring the PyTorch forward (full f32 precision)."""
    C = x.shape[-1]
    hp = jax.lax.Precision.HIGHEST
    qkv = jnp.einsum("bhwc,oc->bhwo", x, w_qkv, precision=hp) + b_qkv
    aq = jnp.einsum("bhwc,rc->bhwr", x, w_a_q, precision=hp)
    new_q = jnp.einsum("bhwr,or->bhwo", aq, w_b_q, precision=hp)
    av = jnp.einsum("bhwc,rc->bhwr", x, w_a_v, precision=hp)
    new_v = jnp.einsum("bhwr,or->bhwo", av, w_b_v, precision=hp)
    qkv = qkv.at[..., :C].add(new_q)
    qkv = qkv.at[..., -C:].add(new_v)
    return qkv


if __name__ == "__main__":
    # Small but lane-aligned config: M = 2*8*8 = 128 tokens, C = 128.
    B, H, W, C = 2, 8, 8, 128
    R = 4
    dtype = jnp.float32

    key = jax.random.PRNGKey(0)
    kx, kw, kb, ka1, kb1, ka2, kb2, kx2 = jax.random.split(key, 8)

    x = jax.random.normal(kx, (B, H, W, C), dtype)
    # PyTorch nn.Linear weight layout: (out_features, in_features).
    w_qkv = jax.random.normal(kw, (3 * C, C), dtype) * 0.05   # frozen qkv (bias=True)
    b_qkv = jax.random.normal(kb, (3 * C,), dtype) * 0.05
    w_a_q = jax.random.normal(ka1, (R, C), dtype) * 0.05      # linear_a_q (bias=False)
    w_b_q = jax.random.normal(kb1, (C, R), dtype) * 0.05      # linear_b_q (bias=False)
    w_a_v = jax.random.normal(ka2, (R, C), dtype) * 0.05      # linear_a_v
    w_b_v = jax.random.normal(kb2, (C, R), dtype) * 0.05      # linear_b_v

    ref = _reference(x, w_qkv, b_qkv, w_a_q, w_b_q, w_a_v, w_b_v)

    # Load-time weight prep (transpose/cast hoisted out of the per-call jit).
    wf32 = prepare_lora_qkv_weights(w_qkv, b_qkv, w_a_q, w_b_q, w_a_v, w_b_v,
                                    compute_dtype=jnp.float32)
    wbf16 = prepare_lora_qkv_weights(w_qkv, b_qkv, w_a_q, w_b_q, w_a_v, w_b_v,
                                     compute_dtype=jnp.bfloat16)

    # 1) f32 compute path, exact single tile -- tight correctness check.
    out_f32 = jax.block_until_ready(lora_qkv_forward(x, *wf32, tm=128))
    assert out_f32.shape == (B, H, W, 3 * C)
    assert jnp.allclose(out_f32, ref, atol=1e-3, rtol=1e-3), "f32 mismatch vs reference"

    # 2) bf16 production path, auto tile size.
    out_bf16 = jax.block_until_ready(lora_qkv_forward(x, *wbf16))
    assert out_bf16.shape == (B, H, W, 3 * C)
    assert jnp.allclose(out_bf16, ref, atol=5e-2, rtol=5e-2), "bf16 mismatch vs reference"

    # 3) Ragged token count (SAM 14x14 window, M=196): exercises the masked
    #    partial last tile (no pad / slice HBM copies).
    xr = jax.random.normal(kx2, (1, 14, 14, C), dtype)
    ref_r = _reference(xr, w_qkv, b_qkv, w_a_q, w_b_q, w_a_v, w_b_v)
    out_r = jax.block_until_ready(lora_qkv_forward(xr, *wf32, tm=128))
    assert out_r.shape == (1, 14, 14, 3 * C)
    assert jnp.allclose(out_r, ref_r, atol=1e-3, rtol=1e-3), "ragged-M mismatch vs reference"

    print("KERNEL_OK")
</pallas_src>

<mosaic_0001>
module attributes {stable_mosaic.version = 11 : i64} {
  func.func @_lora_qkv_kernel(%arg0: i32, %arg1: memref<128x128xf32, #tpu.memory_space<vmem>>, %arg2: memref<128x384xf32, #tpu.memory_space<vmem>>, %arg3: memref<1x384xf32, #tpu.memory_space<vmem>>, %arg4: memref<128x8xf32, #tpu.memory_space<vmem>>, %arg5: memref<4x128xf32, #tpu.memory_space<vmem>>, %arg6: memref<4x128xf32, #tpu.memory_space<vmem>>, %arg7: memref<128x384xf32, #tpu.memory_space<vmem>>) attributes {dimension_semantics = [#tpu.dimension_semantics<parallel>], iteration_bounds = array<i64: 1>, scalar_prefetch = 0 : i64, scratch_operands = 0 : i64, tpu.core_type = #tpu.core_type<tc>, window_params = [{transform_indices = @transform_0, window_bounds = array<i64: 128, 128>}, {pipeline_mode = #tpu.pipeline_mode<synchronous>, transform_indices = @transform_1, window_bounds = array<i64: 128, 384>}, {pipeline_mode = #tpu.pipeline_mode<synchronous>, transform_indices = @transform_2, window_bounds = array<i64: 1, 384>}, {pipeline_mode = #tpu.pipeline_mode<synchronous>, transform_indices = @transform_3, window_bounds = array<i64: 128, 8>}, {pipeline_mode = #tpu.pipeline_mode<synchronous>, transform_indices = @transform_4, window_bounds = array<i64: 4, 128>}, {pipeline_mode = #tpu.pipeline_mode<synchronous>, transform_indices = @transform_5, window_bounds = array<i64: 4, 128>}, {transform_indices = @transform_6, window_bounds = array<i64: 128, 384>}]} {
    %c0 = arith.constant 0 : index
    %c0_0 = arith.constant 0 : index
    %0 = vector.load %arg1[%c0, %c0_0] : memref<128x128xf32, #tpu.memory_space<vmem>>, vector<128x128xf32>
    %c0_1 = arith.constant 0 : index
    %c0_2 = arith.constant 0 : index
    %1 = vector.load %arg2[%c0_1, %c0_2] : memref<128x384xf32, #tpu.memory_space<vmem>>, vector<128x384xf32>
    %cst = arith.constant dense<0.000000e+00> : vector<128x384xf32>
    %2 = tpu.matmul %0, %1, %cst {dimension_numbers = #tpu.dot_dimension_numbers<[1], [0], [0], [1], [0, 0, 1, 1], [], []>} : vector<128x128xf32>, vector<128x384xf32>, vector<128x384xf32> -> vector<128x384xf32>
    %c0_3 = arith.constant 0 : index
    %c0_4 = arith.constant 0 : index
    %3 = vector.load %arg3[%c0_3, %c0_4] : memref<1x384xf32, #tpu.memory_space<vmem>>, vector<1x384xf32>
    %4 = vector.broadcast %3 : vector<1x384xf32> to vector<128x384xf32>
    %5 = arith.addf %2, %4 : vector<128x384xf32>
    %c0_5 = arith.constant 0 : index
    %c0_6 = arith.constant 0 : index
    %6 = vector.load %arg4[%c0_5, %c0_6] : memref<128x8xf32, #tpu.memory_space<vmem>>, vector<128x8xf32>
    %cst_7 = arith.constant dense<0.000000e+00> : vector<128x8xf32>
    %7 = tpu.matmul %0, %6, %cst_7 {dimension_numbers = #tpu.dot_dimension_numbers<[1], [0], [0], [1], [0, 0, 1, 1], [], []>} : vector<128x128xf32>, vector<128x8xf32>, vector<128x8xf32> -> vector<128x8xf32>
    %8 = vector.extract_strided_slice %7 {offsets = [0, 0], sizes = [128, 4], strides = [1, 1]} : vector<128x8xf32> to vector<128x4xf32>
    %c0_8 = arith.constant 0 : index
    %c0_9 = arith.constant 0 : index
    %9 = vector.load %arg5[%c0_8, %c0_9] : memref<4x128xf32, #tpu.memory_space<vmem>>, vector<4x128xf32>
    %cst_10 = arith.constant dense<0.000000e+00> : vector<128x128xf32>
    %10 = tpu.matmul %8, %9, %cst_10 {dimension_numbers = #tpu.dot_dimension_numbers<[1], [0], [0], [1], [0, 0, 1, 1], [], []>} : vector<128x4xf32>, vector<4x128xf32>, vector<128x128xf32> -> vector<128x128xf32>
    %11 = vector.extract_strided_slice %7 {offsets = [0, 4], sizes = [128, 4], strides = [1, 1]} : vector<128x8xf32> to vector<128x4xf32>
    %c0_11 = arith.constant 0 : index
    %c0_12 = arith.constant 0 : index
    %12 = vector.load %arg6[%c0_11, %c0_12] : memref<4x128xf32, #tpu.memory_space<vmem>>, vector<4x128xf32>
    %cst_13 = arith.constant dense<0.000000e+00> : vector<128x128xf32>
    %13 = tpu.matmul %11, %12, %cst_13 {dimension_numbers = #tpu.dot_dimension_numbers<[1], [0], [0], [1], [0, 0, 1, 1], [], []>} : vector<128x4xf32>, vector<4x128xf32>, vector<128x128xf32> -> vector<128x128xf32>
    %14 = vector.extract_strided_slice %5 {offsets = [0, 0], sizes = [128, 128], strides = [1, 1]} : vector<128x384xf32> to vector<128x128xf32>
    %15 = arith.addf %14, %10 : vector<128x128xf32>
    %c0_14 = arith.constant 0 : index
    %c0_15 = arith.constant 0 : index
    %16 = vector.load %arg7[%c0_14, %c0_15] : memref<128x384xf32, #tpu.memory_space<vmem>>, vector<128x128xf32>
    tpu.vector_store %arg7[%c0_14, %c0_15], %15 {strides = array<i32>} : memref<128x384xf32, #tpu.memory_space<vmem>>, vector<128x128xf32>,
    %17 = vector.extract_strided_slice %5 {offsets = [0, 128], sizes = [128, 128], strides = [1, 1]} : vector<128x384xf32> to vector<128x128xf32>
    %c0_16 = arith.constant 0 : index
    %c128 = arith.constant 128 : index
    %18 = vector.load %arg7[%c0_16, %c128] : memref<128x384xf32, #tpu.memory_space<vmem>>, vector<128x128xf32>
    tpu.vector_store %arg7[%c0_16, %c128], %17 {strides = array<i32>} : memref<128x384xf32, #tpu.memory_space<vmem>>, vector<128x128xf32>,
    %19 = vector.extract_strided_slice %5 {offsets = [0, 256], sizes = [128, 128], strides = [1, 1]} : vector<128x384xf32> to vector<128x128xf32>
    %20 = arith.addf %19, %13 : vector<128x128xf32>
    %c0_17 = arith.constant 0 : index
    %c256 = arith.constant 256 : index
    %21 = vector.load %arg7[%c0_17, %c256] : memref<128x384xf32, #tpu.memory_space<vmem>>, vector<128x128xf32>
    tpu.vector_store %arg7[%c0_17, %c256], %20 {strides = array<i32>} : memref<128x384xf32, #tpu.memory_space<vmem>>, vector<128x128xf32>,
    return
  }
  func.func @transform_0(%arg0: i32) -> (i32, i32) {
    %c0_i32 = arith.constant 0 : i32
    %c0_i32_0 = arith.constant 0 : i32
    return %arg0, %c0_i32 : i32, i32
  }
  func.func @transform_1(%arg0: i32) -> (i32, i32) {
    %c0_i32 = arith.constant 0 : i32
    %c0_i32_0 = arith.constant 0 : i32
    %c0_i32_1 = arith.constant 0 : i32
    return %c0_i32, %c0_i32_0 : i32, i32
  }
  func.func @transform_2(%arg0: i32) -> (i32, i32) {
    %c0_i32 = arith.constant 0 : i32
    %c0_i32_0 = arith.constant 0 : i32
    %c0_i32_1 = arith.constant 0 : i32
    return %c0_i32, %c0_i32_0 : i32, i32
  }
  func.func @transform_3(%arg0: i32) -> (i32, i32) {
    %c0_i32 = arith.constant 0 : i32
    %c0_i32_0 = arith.constant 0 : i32
    %c0_i32_1 = arith.constant 0 : i32
    return %c0_i32, %c0_i32_0 : i32, i32
  }
  func.func @transform_4(%arg0: i32) -> (i32, i32) {
    %c0_i32 = arith.constant 0 : i32
    %c0_i32_0 = arith.constant 0 : i32
    %c0_i32_1 = arith.constant 0 : i32
    return %c0_i32, %c0_i32_0 : i32, i32
  }
  func.func @transform_5(%arg0: i32) -> (i32, i32) {
    %c0_i32 = arith.constant 0 : i32
    %c0_i32_0 = arith.constant 0 : i32
    %c0_i32_1 = arith.constant 0 : i32
    return %c0_i32, %c0_i32_0 : i32, i32
  }
  func.func @transform_6(%arg0: i32) -> (i32, i32) {
    %c0_i32 = arith.constant 0 : i32
    %c0_i32_0 = arith.constant 0 : i32
    return %arg0, %c0_i32 : i32, i32
  }
}

</mosaic_0001>

<llo_original>
// kernel: lora_qkv_forward.1
$region0: #{lora_qkv_forward.1}
  #allocation0 [shape = 'u32[]', space=smem, size = 0x4, offset = 0x4, fixed_abs, tag = 'smem constant byte address 0x4 - core index']
  #allocation1 [shape = 'u32[144,128]{1,0:T(1,128)}', space=vmem, size = 0x12000, scoped, tag = 'internal scratch']
  %s0 = inlined_call_operand.vmem [shape: f32[128,128], index: 0, kind: input, shape index: {}]
  %s1 = inlined_call_operand.hbm [shape: f32[128,384], index: 1, kind: input, shape index: {}]
  %s2 = inlined_call_operand.vmem [shape: f32[1,384], index: 2, kind: input, shape index: {}]
  %s3 = inlined_call_operand.vmem [shape: f32[128,8], index: 3, kind: input, shape index: {}]
  %s4 = inlined_call_operand.vmem [shape: f32[4,128], index: 4, kind: input, shape index: {}]
  %s5 = inlined_call_operand.vmem [shape: f32[4,128], index: 5, kind: input, shape index: {}]
  %s6 = inlined_call_operand.hbm [shape: f32[128,384], index: 6, kind: output, shape index: {}]
  %s7 = sld [smem:[#allocation0]]
  $region38: #{lora_qkv_forward.1} parent=0
    _
  %s9 = ssub.s32 1, %s7
  %s10 = scalar_select 0, %s9, %s7
  $region1: #{lora_qkv_forward.1} parent=0
    #allocation2 [shape = 'u8[196608]{0}', space=vmem, size = 0x30000, scoped, tag = 'input window, operand 1, single buffered']
    #allocation3 [shape = 's32[1]{0}', space=sflag, size = 0x4, scoped, tag = 'scoped memory for lora_qkv_forward.1']
    #allocation4 [shape = 's32[1]{0}', space=sflag, size = 0x4, scoped, tag = 'scoped memory for lora_qkv_forward.1']
    #allocation5 [shape = 'u8[196608]{0}', space=vmem, size = 0x30000, scoped, tag = 'output window, operand 0, single buffered']
    %11 = vsyncpa [#allocation3], 0
    %12 = vsyncpa [#allocation4], 0
    // Predicated region
    $region2: #{lora_qkv_forward.1} parent=1 // pred_check
      _
    $region3: #{lora_qkv_forward.1} parent=1 // pred_check_branch
      %14 = sbr.rel (0) target = $region5
    $region4: #{lora_qkv_forward.1} parent=1 // pred_region
      _
    $region5: #{lora_qkv_forward.1} parent=1 // pred_fallthru
      _
    // Predicated region
    $region6: #{lora_qkv_forward.1} parent=1 // pred_check
      _
    $region7: #{lora_qkv_forward.1} parent=1 // pred_check_branch
      %16 = sbr.rel (0) target = $region9
    $region8: #{lora_qkv_forward.1} parent=1 // pred_region
      %s18 = ssub.s32 6144, 6144
      %19 = vsyncadd [#allocation3], %s18
      %s20 = sshll.u32 [#allocation2], 4
      %s21 = int_to_ptr.vmem [resolvable:$true] %s20
      %26 = dma.hbm_to_vmem [thread:$0]  %s1, 6144, %s21, [#allocation3], 384, 384, 24
    $region9: #{lora_qkv_forward.1} parent=1 // pred_fallthru
      _
    // Predicated region
    $region10: #{lora_qkv_forward.1} parent=1 // pred_check
      _
    $region11: #{lora_qkv_forward.1} parent=1 // pred_check_branch
      %28 = sbr.rel (0) target = $region13
    $region12: #{lora_qkv_forward.1} parent=1 // pred_region
      _
    $region13: #{lora_qkv_forward.1} parent=1 // pred_fallthru
      _
    // Predicated region
    $region14: #{lora_qkv_forward.1} parent=1 // pred_check
      _
    $region15: #{lora_qkv_forward.1} parent=1 // pred_check_branch
      %30 = sbr.rel (0) target = $region17
    $region16: #{lora_qkv_forward.1} parent=1 // pred_region
      _
    $region17: #{lora_qkv_forward.1} parent=1 // pred_fallthru
      _
    // Predicated region
    $region18: #{lora_qkv_forward.1} parent=1 // pred_check
      _
    $region19: #{lora_qkv_forward.1} parent=1 // pred_check_branch
      %32 = sbr.rel (0) target = $region21
    $region20: #{lora_qkv_forward.1} parent=1 // pred_region
      _
    $region21: #{lora_qkv_forward.1} parent=1 // pred_fallthru
      _
    // Predicated region
    $region22: #{lora_qkv_forward.1} parent=1 // pred_check
      _
    $region23: #{lora_qkv_forward.1} parent=1 // pred_check_branch
      %34 = sbr.rel (0) target = $region25
    $region24: #{lora_qkv_forward.1} parent=1 // pred_region
      _
    $region25: #{lora_qkv_forward.1} parent=1 // pred_fallthru
      _
    // Predicated region
    $region26: #{lora_qkv_forward.1} parent=1 // pred_check
      _
    $region27: #{lora_qkv_forward.1} parent=1 // pred_check_branch
      %36 = sbr.rel (0) target = $region29
    $region28: #{lora_qkv_forward.1} parent=1 // pred_region
      %37 = dma.done [#allocation3], 6144
    $region29: #{lora_qkv_forward.1} parent=1 // pred_fallthru
      _
    %v38 = vld [vmem:[%s0] sm:$0xff]
    %v39 = vld [vmem:[%s0 + $0x8] sm:$0xff]
    %v40 = vld [vmem:[%s0 + $0x10] sm:$0xff]
    %v41 = vld [vmem:[%s0 + $0x18] sm:$0xff]
    %v42 = vld [vmem:[%s0 + $0x20] sm:$0xff]
    %v43 = vld [vmem:[%s0 + $0x28] sm:$0xff]
    %v44 = vld [vmem:[%s0 + $0x30] sm:$0xff]
    %v45 = vld [vmem:[%s0 + $0x38] sm:$0xff]
    %v46 = vld [vmem:[%s0 + $0x40] sm:$0xff]
    %v47 = vld [vmem:[%s0 + $0x48] sm:$0xff]
    %v48 = vld [vmem:[%s0 + $0x50] sm:$0xff]
    %v49 = vld [vmem:[%s0 + $0x58] sm:$0xff]
    %v50 = vld [vmem:[%s0 + $0x60] sm:$0xff]
    %v51 = vld [vmem:[%s0 + $0x68] sm:$0xff]
    %v52 = vld [vmem:[%s0 + $0x70] sm:$0xff]
    %v53 = vld [vmem:[%s0 + $0x78] sm:$0xff]
    %v54 = vld [vmem:[#allocation2] sm:$0xff]
    %v55 = vld [vmem:[#allocation2 + $0x8] sm:$0xff]
    %v56 = vld [vmem:[#allocation2 + $0x10] sm:$0xff]
    %v57 = vld [vmem:[#allocation2 + $0x18] sm:$0xff]
    %v58 = vld [vmem:[#allocation2 + $0x20] sm:$0xff]
    %v59 = vld [vmem:[#allocation2 + $0x28] sm:$0xff]
    %v60 = vld [vmem:[#allocation2 + $0x30] sm:$0xff]
    %v61 = vld [vmem:[#allocation2 + $0x38] sm:$0xff]
    %v62 = vld [vmem:[#allocation2 + $0x40] sm:$0xff]
    %v63 = vld [vmem:[#allocation2 + $0x48] sm:$0xff]
    %v64 = vld [vmem:[#allocation2 + $0x50] sm:$0xff]
    %v65 = vld [vmem:[#allocation2 + $0x58] sm:$0xff]
    %v66 = vld [vmem:[#allocation2 + $0x60] sm:$0xff]
    %v67 = vld [vmem:[#allocation2 + $0x68] sm:$0xff]
    %v68 = vld [vmem:[#allocation2 + $0x70] sm:$0xff]
    %v69 = vld [vmem:[#allocation2 + $0x78] sm:$0xff]
    %v70 = vld [vmem:[#allocation2 + $0x80] sm:$0xff]
    %v71 = vld [vmem:[#allocation2 + $0x88] sm:$0xff]
    %v72 = vld [vmem:[#allocation2 + $0x90] sm:$0xff]
    %v73 = vld [vmem:[#allocation2 + $0x98] sm:$0xff]
    %v74 = vld [vmem:[#allocation2 + $0xa0] sm:$0xff]
    %v75 = vld [vmem:[#allocation2 + $0xa8] sm:$0xff]
    %v76 = vld [vmem:[#allocation2 + $0xb0] sm:$0xff]
    %v77 = vld [vmem:[#allocation2 + $0xb8] sm:$0xff]
    %v78 = vld [vmem:[#allocation2 + $0xc0] sm:$0xff]
    %v79 = vld [vmem:[#allocation2 + $0xc8] sm:$0xff]
    %v80 = vld [vmem:[#allocation2 + $0xd0] sm:$0xff]
    %v81 = vld [vmem:[#allocation2 + $0xd8] sm:$0xff]
    %v82 = vld [vmem:[#allocation2 + $0xe0] sm:$0xff]
    %v83 = vld [vmem:[#allocation2 + $0xe8] sm:$0xff]
    %v84 = vld [vmem:[#allocation2 + $0xf0] sm:$0xff]
    %v85 = vld [vmem:[#allocation2 + $0xf8] sm:$0xff]
    %v86 = vld [vmem:[#allocation2 + $0x100] sm:$0xff]
    %v87 = vld [vmem:[#allocation2 + $0x108] sm:$0xff]
    %v88 = vld [vmem:[#allocation2 + $0x110] sm:$0xff]
    %v89 = vld [vmem:[#allocation2 + $0x118] sm:$0xff]
    %v90 = vld [vmem:[#allocation2 + $0x120] sm:$0xff]
    %v91 = vld [vmem:[#allocation2 + $0x128] sm:$0xff]
    %v92 = vld [vmem:[#allocation2 + $0x130] sm:$0xff]
    %v93 = vld [vmem:[#allocation2 + $0x138] sm:$0xff]
    %v94 = vld [vmem:[#allocation2 + $0x140] sm:$0xff]
    %v95 = vld [vmem:[#allocation2 + $0x148] sm:$0xff]
    %v96 = vld [vmem:[#allocation2 + $0x150] sm:$0xff]
    %v97 = vld [vmem:[#allocation2 + $0x158] sm:$0xff]
    %v98 = vld [vmem:[#allocation2 + $0x160] sm:$0xff]
    %v99 = vld [vmem:[#allocation2 + $0x168] sm:$0xff]
    %v100 = vld [vmem:[#allocation2 + $0x170] sm:$0xff]
    %v101 = vld [vmem:[#allocation2 + $0x178] sm:$0xff]
    %v102 = vld [vmem:[%s2] sm:$0x7]
    %v104 = vlaneseq
    %v105 = vshrl.u32 %v104, 7
    %v106 = vsub.s32 0, %v105
    %v107 = vrot.slane %v102, %v106
    %v108 = vlaneseq
    %v109 = vshrl.u32 %v108, 7
    %v110 = vsub.s32 1, %v109
    %v111 = vrot.slane %v102, %v110
    %v112 = vlaneseq
    %v113 = vshrl.u32 %v112, 7
    %v114 = vsub.s32 2, %v113
    %v115 = vrot.slane %v102, %v114
    %119 = vmatprep.subr.mxu0 %v55
    %120 = vmatpush1.msra.mxu0 %v54
    %121 = vmatprep.subr.mxu0 %v58
    %122 = vmatpush1.msra.mxu0 %v57
    %123 = vmatprep.subr.mxu0 %v61
    %124 = vmatpush1.msra.mxu0 %v60
    %125 = vmatprep.subr.mxu0 %v64
    %126 = vmatpush1.msra.mxu0 %v63
    %127 = vmatprep.subr.mxu0 %v67
    %128 = vmatpush1.msra.mxu0 %v66
    %129 = vmatprep.subr.mxu0 %v70
    %130 = vmatpush1.msra.mxu0 %v69
    %131 = vmatprep.subr.mxu0 %v73
    %132 = vmatpush1.msra.mxu0 %v72
    %133 = vmatprep.subr.mxu0 %v76
    %134 = vmatpush1.msra.mxu0 %v75
    %135 = vmatprep.subr.mxu0 %v79
    %136 = vmatpush1.msra.mxu0 %v78
    %137 = vmatprep.subr.mxu0 %v82
    %138 = vmatpush1.msra.mxu0 %v81
    %139 = vmatprep.subr.mxu0 %v85
    %140 = vmatpush1.msra.mxu0 %v84
    %141 = vmatprep.subr.mxu0 %v88
    %142 = vmatpush1.msra.mxu0 %v87
    %143 = vmatprep.subr.mxu0 %v91
    %144 = vmatpush1.msra.mxu0 %v90
    %145 = vmatprep.subr.mxu0 %v94
    %146 = vmatpush1.msra.mxu0 %v93
    %147 = vmatprep.subr.mxu0 %v97
    %148 = vmatpush1.msra.mxu0 %v96
    %149 = vmatprep.subr.mxu0 %v100
    %150 = vmatpush1.msra.mxu0 %v99
    %151 = vmatprep.subr.mxu0 0.0
    %152 = vmatpush1.msra.mxu0 0.0
    %153 = vmatprep.subr.mxu0 0.0
    %154 = vmatpush1.msra.mxu0 0.0
    %155 = vmatprep.subr.mxu0 0.0
    %156 = vmatpush1.msra.mxu0 0.0
    %157 = vmatprep.subr.mxu0 0.0
    %158 = vmatpush1.msra.mxu0 0.0
    %159 = vmatprep.subr.mxu0 0.0
    %160 = vmatpush1.msra.mxu0 0.0
    %161 = vmatprep.subr.mxu0 0.0
    %162 = vmatpush1.msra.mxu0 0.0
    %163 = vmatprep.subr.mxu0 0.0
    %164 = vmatpush1.msra.mxu0 0.0
    %165 = vmatprep.subr.mxu0 0.0
    %166 = vmatpush1.msra.mxu0 0.0
    %167 = vmatprep.subr.mxu0 0.0
    %168 = vmatpush1.msra.mxu0 0.0
    %169 = vmatprep.subr.mxu0 0.0
    %170 = vmatpush1.msra.mxu0 0.0
    %171 = vmatprep.subr.mxu0 0.0
    %172 = vmatpush1.msra.mxu0 0.0
    %173 = vmatprep.subr.mxu0 0.0
    %174 = vmatpush1.msra.mxu0 0.0
    %175 = vmatprep.subr.mxu0 0.0
    %176 = vmatpush1.msra.mxu0 0.0
    %177 = vmatprep.subr.mxu0 0.0
    %178 = vmatpush1.msra.mxu0 0.0
    %179 = vmatprep.subr.mxu0 0.0
    %180 = vmatpush1.msra.mxu0 0.0
    %181 = vmatprep.subr.mxu0 0.0
    %182 = vmatpush1.msra.mxu0 0.0
    %183 = vmatprep.mubr.f32.mxu0 0.0
    %184 = vmatmul.mubr.f32.gmra.mrb[0].mxu0 %v38
    %v185 = vpop.f32.mrb[0].mxu0
    %v186 = vadd.f32 %v107, %v185
    %v187 = vpop.f32.mrb[0].mxu0
    %v188 = vadd.f32 %v111, %v187
    %189 = vmatprep.mubr.f32.mxu0 0.0
    %190 = vmatmul.mubr.f32.gmra.mrb[0].mxu0 %v39
    %v191 = vpop.f32.mrb[0].mxu0
    %v192 = vadd.f32 %v107, %v191
    %v193 = vpop.f32.mrb[0].mxu0
    %v194 = vadd.f32 %v111, %v193
    %195 = vmatprep.mubr.f32.mxu0 0.0
    %196 = vmatmul.mubr.f32.gmra.mrb[0].mxu0 %v40
    %v197 = vpop.f32.mrb[0].mxu0
    %v198 = vadd.f32 %v107, %v197
    %v199 = vpop.f32.mrb[0].mxu0
    %v200 = vadd.f32 %v111, %v199
    %201 = vmatprep.mubr.f32.mxu0 0.0
    %202 = vmatmul.mubr.f32.gmra.mrb[0].mxu0 %v41
    %v203 = vpop.f32.mrb[0].mxu0
    %v204 = vadd.f32 %v107, %v203
    %v205 = vpop.f32.mrb[0].mxu0
    %v206 = vadd.f32 %v111, %v205
    %207 = vmatprep.mubr.f32.mxu0 0.0
    %208 = vmatmul.mubr.f32.gmra.mrb[0].mxu0 %v42
    %v209 = vpop.f32.mrb[0].mxu0
    %v210 = vadd.f32 %v107, %v209
    %v211 = vpop.f32.mrb[0].mxu0
    %v212 = vadd.f32 %v111, %v211
    %213 = vmatprep.mubr.f32.mxu0 0.0
    %214 = vmatmul.mubr.f32.gmra.mrb[0].mxu0 %v43
    %v215 = vpop.f32.mrb[0].mxu0
    %v216 = vadd.f32 %v107, %v215
    %v217 = vpop.f32.mrb[0].mxu0
    %v218 = vadd.f32 %v111, %v217
    %219 = vmatprep.mubr.f32.mxu0 0.0
    %220 = vmatmul.mubr.f32.gmra.mrb[0].mxu0 %v44
    %v221 = vpop.f32.mrb[0].mxu0
    %v222 = vadd.f32 %v107, %v221
    %v223 = vpop.f32.mrb[0].mxu0
    %v224 = vadd.f32 %v111, %v223
    %225 = vmatprep.mubr.f32.mxu0 0.0
    %226 = vmatmul.mubr.f32.gmra.mrb[0].mxu0 %v45
    %v227 = vpop.f32.mrb[0].mxu0
    %v228 = vadd.f32 %v107, %v227
    %v229 = vpop.f32.mrb[0].mxu0
    %v230 = vadd.f32 %v111, %v229
    %231 = vmatprep.mubr.f32.mxu0 0.0
    %232 = vmatmul.mubr.f32.gmra.mrb[0].mxu0 %v46
    %v233 = vpop.f32.mrb[0].mxu0
    %v234 = vadd.f32 %v107, %v233
    %v235 = vpop.f32.mrb[0].mxu0
    %v236 = vadd.f32 %v111, %v235
    %237 = vmatprep.mubr.f32.mxu0 0.0
    %238 = vmatmul.mubr.f32.gmra.mrb[0].mxu0 %v47
    %v239 = vpop.f32.mrb[0].mxu0
    %v240 = vadd.f32 %v107, %v239
    %v241 = vpop.f32.mrb[0].mxu0
    %v242 = vadd.f32 %v111, %v241
    %243 = vmatprep.mubr.f32.mxu0 0.0
    %244 = vmatmul.mubr.f32.gmra.mrb[0].mxu0 %v48
    %v245 = vpop.f32.mrb[0].mxu0
    %v246 = vadd.f32 %v107, %v245
    %v247 = vpop.f32.mrb[0].mxu0
    %v248 = vadd.f32 %v111, %v247
    %249 = vmatprep.mubr.f32.mxu0 0.0
    %250 = vmatmul.mubr.f32.gmra.mrb[0].mxu0 %v49
    %v251 = vpop.f32.mrb[0].mxu0
    %v252 = vadd.f32 %v107, %v251
    %v253 = vpop.f32.mrb[0].mxu0
    %v254 = vadd.f32 %v111, %v253
    %255 = vmatprep.mubr.f32.mxu0 0.0
    %256 = vmatmul.mubr.f32.gmra.mrb[0].mxu0 %v50
    %v257 = vpop.f32.mrb[0].mxu0
    %v258 = vadd.f32 %v107, %v257
    %v259 = vpop.f32.mrb[0].mxu0
    %v260 = vadd.f32 %v111, %v259
    %261 = vmatprep.mubr.f32.mxu0 0.0
    %262 = vmatmul.mubr.f32.gmra.mrb[0].mxu0 %v51
    %v263 = vpop.f32.mrb[0].mxu0
    %v264 = vadd.f32 %v107, %v263
    %v265 = vpop.f32.mrb[0].mxu0
    %v266 = vadd.f32 %v111, %v265
    %267 = vmatprep.mubr.f32.mxu0 0.0
    %268 = vmatmul.mubr.f32.gmra.mrb[0].mxu0 %v52
    %v269 = vpop.f32.mrb[0].mxu0
    %v270 = vadd.f32 %v107, %v269
    %v271 = vpop.f32.mrb[0].mxu0
    %v272 = vadd.f32 %v111, %v271
    %273 = vmatprep.mubr.f32.mxu0 0.0
    %274 = vmatmul.mubr.f32.gmra.mrb[0].mxu0 %v53
    %v275 = vpop.f32.mrb[0].mxu0
    %v276 = vadd.f32 %v107, %v275
    %v277 = vpop.f32.mrb[0].mxu0
    %v278 = vadd.f32 %v111, %v277
    %279 = vdwg.mxu0
    %280 = vmatprep.subr.mxu0 0.0
    %281 = vmatpush1.msra.mxu0 %v56
    %282 = vmatprep.subr.mxu0 0.0
    %283 = vmatpush1.msra.mxu0 %v59
    %284 = vmatprep.subr.mxu0 0.0
    %285 = vmatpush1.msra.mxu0 %v62
    %286 = vmatprep.subr.mxu0 0.0
    %287 = vmatpush1.msra.mxu0 %v65
    %288 = vmatprep.subr.mxu0 0.0
    %289 = vmatpush1.msra.mxu0 %v68
    %290 = vmatprep.subr.mxu0 0.0
    %291 = vmatpush1.msra.mxu0 %v71
    %292 = vmatprep.subr.mxu0 0.0
    %293 = vmatpush1.msra.mxu0 %v74
    %294 = vmatprep.subr.mxu0 0.0
    %295 = vmatpush1.msra.mxu0 %v77
    %296 = vmatprep.subr.mxu0 0.0
    %297 = vmatpush1.msra.mxu0 %v80
    %298 = vmatprep.subr.mxu0 0.0
    %299 = vmatpush1.msra.mxu0 %v83
    %300 = vmatprep.subr.mxu0 0.0
    %301 = vmatpush1.msra.mxu0 %v86
    %302 = vmatprep.subr.mxu0 0.0
    %303 = vmatpush1.msra.mxu0 %v89
    %304 = vmatprep.subr.mxu0 0.0
    %305 = vmatpush1.msra.mxu0 %v92
    %306 = vmatprep.subr.mxu0 0.0
    %307 = vmatpush1.msra.mxu0 %v95
    %308 = vmatprep.subr.mxu0 0.0
    %309 = vmatpush1.msra.mxu0 %v98
    %310 = vmatprep.subr.mxu0 0.0
    %311 = vmatpush1.msra.mxu0 %v101
    %312 = vmatprep.subr.mxu0 0.0
    %313 = vmatpush1.msra.mxu0 0.0
    %314 = vmatprep.subr.mxu0 0.0
    %315 = vmatpush1.msra.mxu0 0.0
    %316 = vmatprep.subr.mxu0 0.0
    %317 = vmatpush1.msra.mxu0 0.0
    %318 = vmatprep.subr.mxu0 0.0
    %319 = vmatpush1.msra.mxu0 0.0
    %320 = vmatprep.subr.mxu0 0.0
    %321 = vmatpush1.msra.mxu0 0.0
    %322 = vmatprep.subr.mxu0 0.0
    %323 = vmatpush1.msra.mxu0 0.0
    %324 = vmatprep.subr.mxu0 0.0
    %325 = vmatpush1.msra.mxu0 0.0
    %326 = vmatprep.subr.mxu0 0.0
    %327 = vmatpush1.msra.mxu0 0.0
    %328 = vmatprep.subr.mxu0 0.0
    %329 = vmatpush1.msra.mxu0 0.0
    %330 = vmatprep.subr.mxu0 0.0
    %331 = vmatpush1.msra.mxu0 0.0
    %332 = vmatprep.subr.mxu0 0.0
    %333 = vmatpush1.msra.mxu0 0.0
    %334 = vmatprep.subr.mxu0 0.0
    %335 = vmatpush1.msra.mxu0 0.0
    %336 = vmatprep.subr.mxu0 0.0
    %337 = vmatpush1.msra.mxu0 0.0
    %338 = vmatprep.subr.mxu0 0.0
    %339 = vmatpush1.msra.mxu0 0.0
    %340 = vmatprep.subr.mxu0 0.0
    %341 = vmatpush1.msra.mxu0 0.0
    %342 = vmatprep.subr.mxu0 0.0
    %343 = vmatpush1.msra.mxu0 0.0
    %344 = vmatprep.mubr.f32.mxu0 0.0
    %345 = vmatmul.mubr.f32.gmra.mrb[0].mxu0 %v38
    %v346 = vpop.f32.mrb[0].mxu0
    %v347 = vadd.f32 %v115, %v346
    %v348 = vpop.f32.mrb[0].mxu0
    %349 = vmatprep.mubr.f32.mxu0 0.0
    %350 = vmatmul.mubr.f32.gmra.mrb[0].mxu0 %v39
    %v351 = vpop.f32.mrb[0].mxu0
    %v352 = vadd.f32 %v115, %v351
    %v353 = vpop.f32.mrb[0].mxu0
    %354 = vmatprep.mubr.f32.mxu0 0.0
    %355 = vmatmul.mubr.f32.gmra.mrb[0].mxu0 %v40
    %v356 = vpop.f32.mrb[0].mxu0
    %v357 = vadd.f32 %v115, %v356
    %v358 = vpop.f32.mrb[0].mxu0
    %359 = vmatprep.mubr.f32.mxu0 0.0
    %360 = vmatmul.mubr.f32.gmra.mrb[0].mxu0 %v41
    %v361 = vpop.f32.mrb[0].mxu0
    %v362 = vadd.f32 %v115, %v361
    %v363 = vpop.f32.mrb[0].mxu0
    %364 = vmatprep.mubr.f32.mxu0 0.0
    %365 = vmatmul.mubr.f32.gmra.mrb[0].mxu0 %v42
    %v366 = vpop.f32.mrb[0].mxu0
    %v367 = vadd.f32 %v115, %v366
    %v368 = vpop.f32.mrb[0].mxu0
    %369 = vmatprep.mubr.f32.mxu0 0.0
    %370 = vmatmul.mubr.f32.gmra.mrb[0].mxu0 %v43
    %v371 = vpop.f32.mrb[0].mxu0
    %v372 = vadd.f32 %v115, %v371
    %v373 = vpop.f32.mrb[0].mxu0
    %374 = vmatprep.mubr.f32.mxu0 0.0
    %375 = vmatmul.mubr.f32.gmra.mrb[0].mxu0 %v44
    %v376 = vpop.f32.mrb[0].mxu0
    %v377 = vadd.f32 %v115, %v376
    %v378 = vpop.f32.mrb[0].mxu0
    %379 = vmatprep.mubr.f32.mxu0 0.0
    %380 = vmatmul.mubr.f32.gmra.mrb[0].mxu0 %v45
    %v381 = vpop.f32.mrb[0].mxu0
    %v382 = vadd.f32 %v115, %v381
    %v383 = vpop.f32.mrb[0].mxu0
    %384 = vmatprep.mubr.f32.mxu0 0.0
    %385 = vmatmul.mubr.f32.gmra.mrb[0].mxu0 %v46
    %v386 = vpop.f32.mrb[0].mxu0
    %v387 = vadd.f32 %v115, %v386
    %v388 = vpop.f32.mrb[0].mxu0
    %389 = vmatprep.mubr.f32.mxu0 0.0
    %390 = vmatmul.mubr.f32.gmra.mrb[0].mxu0 %v47
    %v391 = vpop.f32.mrb[0].mxu0
    %v392 = vadd.f32 %v115, %v391
    %v393 = vpop.f32.mrb[0].mxu0
    %394 = vmatprep.mubr.f32.mxu0 0.0
    %395 = vmatmul.mubr.f32.gmra.mrb[0].mxu0 %v48
    %v396 = vpop.f32.mrb[0].mxu0
    %v397 = vadd.f32 %v115, %v396
    %v398 = vpop.f32.mrb[0].mxu0
    %399 = vmatprep.mubr.f32.mxu0 0.0
    %400 = vmatmul.mubr.f32.gmra.mrb[0].mxu0 %v49
    %v401 = vpop.f32.mrb[0].mxu0
    %v402 = vadd.f32 %v115, %v401
    %v403 = vpop.f32.mrb[0].mxu0
    %404 = vmatprep.mubr.f32.mxu0 0.0
    %405 = vmatmul.mubr.f32.gmra.mrb[0].mxu0 %v50
    %v406 = vpop.f32.mrb[0].mxu0
    %v407 = vadd.f32 %v115, %v406
    %v408 = vpop.f32.mrb[0].mxu0
    %409 = vmatprep.mubr.f32.mxu0 0.0
    %410 = vmatmul.mubr.f32.gmra.mrb[0].mxu0 %v51
    %v411 = vpop.f32.mrb[0].mxu0
    %v412 = vadd.f32 %v115, %v411
    %v413 = vpop.f32.mrb[0].mxu0
    %414 = vmatprep.mubr.f32.mxu0 0.0
    %415 = vmatmul.mubr.f32.gmra.mrb[0].mxu0 %v52
    %v416 = vpop.f32.mrb[0].mxu0
    %v417 = vadd.f32 %v115, %v416
    %v418 = vpop.f32.mrb[0].mxu0
    %419 = vmatprep.mubr.f32.mxu0 0.0
    %420 = vmatmul.mubr.f32.gmra.mrb[0].mxu0 %v53
    %v421 = vpop.f32.mrb[0].mxu0
    %v422 = vadd.f32 %v115, %v421
    %v423 = vpop.f32.mrb[0].mxu0
    %424 = vdwg.mxu0
    %v425 = vld [vmem:[%s3] sm:$0xff]
    %v426 = vld [vmem:[%s3 + $0x8] sm:$0xff]
    %v427 = vld [vmem:[%s3 + $0x10] sm:$0xff]
    %v428 = vld [vmem:[%s3 + $0x18] sm:$0xff]
    %v429 = vld [vmem:[%s3 + $0x20] sm:$0xff]
    %v430 = vld [vmem:[%s3 + $0x28] sm:$0xff]
    %v431 = vld [vmem:[%s3 + $0x30] sm:$0xff]
    %v432 = vld [vmem:[%s3 + $0x38] sm:$0xff]
    %v433 = vld [vmem:[%s3 + $0x40] sm:$0xff]
    %v434 = vld [vmem:[%s3 + $0x48] sm:$0xff]
    %v435 = vld [vmem:[%s3 + $0x50] sm:$0xff]
    %v436 = vld [vmem:[%s3 + $0x58] sm:$0xff]
    %v437 = vld [vmem:[%s3 + $0x60] sm:$0xff]
    %v438 = vld [vmem:[%s3 + $0x68] sm:$0xff]
    %v439 = vld [vmem:[%s3 + $0x70] sm:$0xff]
    %v440 = vld [vmem:[%s3 + $0x78] sm:$0xff]
    %441 = vmatprep.subr.mxu0 0.0
    %442 = vmatpush1.msra.mxu0 %v425
    %443 = vmatprep.subr.mxu0 0.0
    %444 = vmatpush1.msra.mxu0 %v426
    %445 = vmatprep.subr.mxu0 0.0
    %446 = vmatpush1.msra.mxu0 %v427
    %447 = vmatprep.subr.mxu0 0.0
    %448 = vmatpush1.msra.mxu0 %v428
    %449 = vmatprep.subr.mxu0 0.0
    %450 = vmatpush1.msra.mxu0 %v429
    %451 = vmatprep.subr.mxu0 0.0
    %452 = vmatpush1.msra.mxu0 %v430
    %453 = vmatprep.subr.mxu0 0.0
    %454 = vmatpush1.msra.mxu0 %v431
    %455 = vmatprep.subr.mxu0 0.0
    %456 = vmatpush1.msra.mxu0 %v432
    %457 = vmatprep.subr.mxu0 0.0
    %458 = vmatpush1.msra.mxu0 %v433
    %459 = vmatprep.subr.mxu0 0.0
    %460 = vmatpush1.msra.mxu0 %v434
    %461 = vmatprep.subr.mxu0 0.0
    %462 = vmatpush1.msra.mxu0 %v435
    %463 = vmatprep.subr.mxu0 0.0
    %464 = vmatpush1.msra.mxu0 %v436
    %465 = vmatprep.subr.mxu0 0.0
    %466 = vmatpush1.msra.mxu0 %v437
    %467 = vmatprep.subr.mxu0 0.0
    %468 = vmatpush1.msra.mxu0 %v438
    %469 = vmatprep.subr.mxu0 0.0
    %470 = vmatpush1.msra.mxu0 %v439
    %471 = vmatprep.subr.mxu0 0.0
    %472 = vmatpush1.msra.mxu0 %v440
    %473 = vmatprep.subr.mxu0 0.0
    %474 = vmatpush1.msra.mxu0 0.0
    %475 = vmatprep.subr.mxu0 0.0
    %476 = vmatpush1.msra.mxu0 0.0
    %477 = vmatprep.subr.mxu0 0.0
    %478 = vmatpush1.msra.mxu0 0.0
    %479 = vmatprep.subr.mxu0 0.0
    %480 = vmatpush1.msra.mxu0 0.0
    %481 = vmatprep.subr.mxu0 0.0
    %482 = vmatpush1.msra.mxu0 0.0
    %483 = vmatprep.subr.mxu0 0.0
    %484 = vmatpush1.msra.mxu0 0.0
    %485 = vmatprep.subr.mxu0 0.0
    %486 = vmatpush1.msra.mxu0 0.0
    %487 = vmatprep.subr.mxu0 0.0
    %488 = vmatpush1.msra.mxu0 0.0
    %489 = vmatprep.subr.mxu0 0.0
    %490 = vmatpush1.msra.mxu0 0.0
    %491 = vmatprep.subr.mxu0 0.0
    %492 = vmatpush1.msra.mxu0 0.0
    %493 = vmatprep.subr.mxu0 0.0
    %494 = vmatpush1.msra.mxu0 0.0
    %495 = vmatprep.subr.mxu0 0.0
    %496 = vmatpush1.msra.mxu0 0.0
    %497 = vmatprep.subr.mxu0 0.0
    %498 = vmatpush1.msra.mxu0 0.0
    %499 = vmatprep.subr.mxu0 0.0
    %500 = vmatpush1.msra.mxu0 0.0
    %501 = vmatprep.subr.mxu0 0.0
    %502 = vmatpush1.msra.mxu0 0.0
    %503 = vmatprep.subr.mxu0 0.0
    %504 = vmatpush1.msra.mxu0 0.0
    %505 = vmatprep.mubr.f32.mxu0 0.0
    %506 = vmatmul.mubr.f32.gmra.mrb[0].mxu0 %v38
    %v507 = vpop.f32.mrb[0].mxu0
    %v508 = vadd.f32 0.0, %v507
    %v509 = vpop.f32.mrb[0].mxu0
    %510 = vmatprep.mubr.f32.mxu0 0.0
    %511 = vmatmul.mubr.f32.gmra.mrb[0].mxu0 %v39
    %v512 = vpop.f32.mrb[0].mxu0
    %v513 = vadd.f32 0.0, %v512
    %v514 = vpop.f32.mrb[0].mxu0
    %515 = vmatprep.mubr.f32.mxu0 0.0
    %516 = vmatmul.mubr.f32.gmra.mrb[0].mxu0 %v40
    %v517 = vpop.f32.mrb[0].mxu0
    %v518 = vadd.f32 0.0, %v517
    %v519 = vpop.f32.mrb[0].mxu0
    %520 = vmatprep.mubr.f32.mxu0 0.0
    %521 = vmatmul.mubr.f32.gmra.mrb[0].mxu0 %v41
    %v522 = vpop.f32.mrb[0].mxu0
    %v523 = vadd.f32 0.0, %v522
    %v524 = vpop.f32.mrb[0].mxu0
    %525 = vmatprep.mubr.f32.mxu0 0.0
    %526 = vmatmul.mubr.f32.gmra.mrb[0].mxu0 %v42
    %v527 = vpop.f32.mrb[0].mxu0
    %v528 = vadd.f32 0.0, %v527
    %v529 = vpop.f32.mrb[0].mxu0
    %530 = vmatprep.mubr.f32.mxu0 0.0
    %531 = vmatmul.mubr.f32.gmra.mrb[0].mxu0 %v43
    %v532 = vpop.f32.mrb[0].mxu0
    %v533 = vadd.f32 0.0, %v532
    %v534 = vpop.f32.mrb[0].mxu0
    %535 = vmatprep.mubr.f32.mxu0 0.0
    %536 = vmatmul.mubr.f32.gmra.mrb[0].mxu0 %v44
    %v537 = vpop.f32.mrb[0].mxu0
    %v538 = vadd.f32 0.0, %v537
    %v539 = vpop.f32.mrb[0].mxu0
    %540 = vmatprep.mubr.f32.mxu0 0.0
    %541 = vmatmul.mubr.f32.gmra.mrb[0].mxu0 %v45
    %v542 = vpop.f32.mrb[0].mxu0
    %v543 = vadd.f32 0.0, %v542
    %v544 = vpop.f32.mrb[0].mxu0
    %545 = vmatprep.mubr.f32.mxu0 0.0
    %546 = vmatmul.mubr.f32.gmra.mrb[0].mxu0 %v46
    %v547 = vpop.f32.mrb[0].mxu0
    %v548 = vadd.f32 0.0, %v547
    %v549 = vpop.f32.mrb[0].mxu0
    %550 = vmatprep.mubr.f32.mxu0 0.0
    %551 = vmatmul.mubr.f32.gmra.mrb[0].mxu0 %v47
    %v552 = vpop.f32.mrb[0].mxu0
    %v553 = vadd.f32 0.0, %v552
    %v554 = vpop.f32.mrb[0].mxu0
    %555 = vmatprep.mubr.f32.mxu0 0.0
    %556 = vmatmul.mubr.f32.gmra.mrb[0].mxu0 %v48
    %v557 = vpop.f32.mrb[0].mxu0
    %v558 = vadd.f32 0.0, %v557
    %v559 = vpop.f32.mrb[0].mxu0
    %560 = vmatprep.mubr.f32.mxu0 0.0
    %561 = vmatmul.mubr.f32.gmra.mrb[0].mxu0 %v49
    %v562 = vpop.f32.mrb[0].mxu0
    %v563 = vadd.f32 0.0, %v562
    %v564 = vpop.f32.mrb[0].mxu0
    %565 = vmatprep.mubr.f32.mxu0 0.0
    %566 = vmatmul.mubr.f32.gmra.mrb[0].mxu0 %v50
    %v567 = vpop.f32.mrb[0].mxu0
    %v568 = vadd.f32 0.0, %v567
    %v569 = vpop.f32.mrb[0].mxu0
    %570 = vmatprep.mubr.f32.mxu0 0.0
    %571 = vmatmul.mubr.f32.gmra.mrb[0].mxu0 %v51
    %v572 = vpop.f32.mrb[0].mxu0
    %v573 = vadd.f32 0.0, %v572
    %v574 = vpop.f32.mrb[0].mxu0
    %575 = vmatprep.mubr.f32.mxu0 0.0
    %576 = vmatmul.mubr.f32.gmra.mrb[0].mxu0 %v52
    %v577 = vpop.f32.mrb[0].mxu0
    %v578 = vadd.f32 0.0, %v577
    %v579 = vpop.f32.mrb[0].mxu0
    %580 = vmatprep.mubr.f32.mxu0 0.0
    %581 = vmatmul.mubr.f32.gmra.mrb[0].mxu0 %v53
    %v582 = vpop.f32.mrb[0].mxu0
    %v583 = vadd.f32 0.0, %v582
    %v584 = vpop.f32.mrb[0].mxu0
    %585 = vdwg.mxu0
    %v586 = vld [vmem:[%s4] sm:$0xf]
    %vm587 = vcmask 31744
    %v589 = vsel %vm587, %v508, 0
    %v592 = vsel %vm587, %v513, 0
    %v595 = vsel %vm587, %v518, 0
    %v598 = vsel %vm587, %v523, 0
    %v601 = vsel %vm587, %v528, 0
    %v604 = vsel %vm587, %v533, 0
    %v607 = vsel %vm587, %v538, 0
    %v610 = vsel %vm587, %v543, 0
    %v613 = vsel %vm587, %v548, 0
    %v616 = vsel %vm587, %v553, 0
    %v619 = vsel %vm587, %v558, 0
    %v622 = vsel %vm587, %v563, 0
    %v625 = vsel %vm587, %v568, 0
    %v628 = vsel %vm587, %v573, 0
    %v631 = vsel %vm587, %v578, 0
    %v634 = vsel %vm587, %v583, 0
    %vm636 = vcmask 1043456
    %v638 = vsel %vm636, %v586, 0
    %640 = vmatprep.subr.mxu0 0.0
    %641 = vmatpush1.msra.mxu0 %v638
    %642 = vmatprep.subr.mxu0 0.0
    %643 = vmatpush1.msra.mxu0 0.0
    %644 = vmatprep.subr.mxu0 0.0
    %645 = vmatpush1.msra.mxu0 0.0
    %646 = vmatprep.subr.mxu0 0.0
    %647 = vmatpush1.msra.mxu0 0.0
    %648 = vmatprep.subr.mxu0 0.0
    %649 = vmatpush1.msra.mxu0 0.0
    %650 = vmatprep.subr.mxu0 0.0
    %651 = vmatpush1.msra.mxu0 0.0
    %652 = vmatprep.subr.mxu0 0.0
    %653 = vmatpush1.msra.mxu0 0.0
    %654 = vmatprep.subr.mxu0 0.0
    %655 = vmatpush1.msra.mxu0 0.0
    %656 = vmatprep.subr.mxu0 0.0
    %657 = vmatpush1.msra.mxu0 0.0
    %658 = vmatprep.subr.mxu0 0.0
    %659 = vmatpush1.msra.mxu0 0.0
    %660 = vmatprep.subr.mxu0 0.0
    %661 = vmatpush1.msra.mxu0 0.0
    %662 = vmatprep.subr.mxu0 0.0
    %663 = vmatpush1.msra.mxu0 0.0
    %664 = vmatprep.subr.mxu0 0.0
    %665 = vmatpush1.msra.mxu0 0.0
    %666 = vmatprep.subr.mxu0 0.0
    %667 = vmatpush1.msra.mxu0 0.0
    %668 = vmatprep.subr.mxu0 0.0
    %669 = vmatpush1.msra.mxu0 0.0
    %670 = vmatprep.subr.mxu0 0.0
    %671 = vmatpush1.msra.mxu0 0.0
    %672 = vmatprep.subr.mxu0 0.0
    %673 = vmatpush1.msra.mxu0 0.0
    %674 = vmatprep.subr.mxu0 0.0
    %675 = vmatpush1.msra.mxu0 0.0
    %676 = vmatprep.subr.mxu0 0.0
    %677 = vmatpush1.msra.mxu0 0.0
    %678 = vmatprep.subr.mxu0 0.0
    %679 = vmatpush1.msra.mxu0 0.0
    %680 = vmatprep.subr.mxu0 0.0
    %681 = vmatpush1.msra.mxu0 0.0
    %682 = vmatprep.subr.mxu0 0.0
    %683 = vmatpush1.msra.mxu0 0.0
    %684 = vmatprep.subr.mxu0 0.0
    %685 = vmatpush1.msra.mxu0 0.0
    %686 = vmatprep.subr.mxu0 0.0
    %687 = vmatpush1.msra.mxu0 0.0
    %688 = vmatprep.subr.mxu0 0.0
    %689 = vmatpush1.msra.mxu0 0.0
    %690 = vmatprep.subr.mxu0 0.0
    %691 = vmatpush1.msra.mxu0 0.0
    %692 = vmatprep.subr.mxu0 0.0
    %693 = vmatpush1.msra.mxu0 0.0
    %694 = vmatprep.subr.mxu0 0.0
    %695 = vmatpush1.msra.mxu0 0.0
    %696 = vmatprep.subr.mxu0 0.0
    %697 = vmatpush1.msra.mxu0 0.0
    %698 = vmatprep.subr.mxu0 0.0
    %699 = vmatpush1.msra.mxu0 0.0
    %700 = vmatprep.subr.mxu0 0.0
    %701 = vmatpush1.msra.mxu0 0.0
    %702 = vmatprep.subr.mxu0 0.0
    %703 = vmatpush1.msra.mxu0 0.0
    %704 = vmatprep.mubr.f32.mxu0 0.0
    %705 = vmatmul.mubr.f32.gmra.mrb[0].mxu0 %v589
    %v706 = vpop.f32.mrb[0].mxu0
    %v707 = vadd.f32 0.0, %v706
    %v708 = vpop.f32.mrb[0].mxu0
    %709 = vmatprep.mubr.f32.mxu0 0.0
    %710 = vmatmul.mubr.f32.gmra.mrb[0].mxu0 %v592
    %v711 = vpop.f32.mrb[0].mxu0
    %v712 = vadd.f32 0.0, %v711
    %v713 = vpop.f32.mrb[0].mxu0
    %714 = vmatprep.mubr.f32.mxu0 0.0
    %715 = vmatmul.mubr.f32.gmra.mrb[0].mxu0 %v595
    %v716 = vpop.f32.mrb[0].mxu0
    %v717 = vadd.f32 0.0, %v716
    %v718 = vpop.f32.mrb[0].mxu0
    %719 = vmatprep.mubr.f32.mxu0 0.0
    %720 = vmatmul.mubr.f32.gmra.mrb[0].mxu0 %v598
    %v721 = vpop.f32.mrb[0].mxu0
    %v722 = vadd.f32 0.0, %v721
    %v723 = vpop.f32.mrb[0].mxu0
    %724 = vmatprep.mubr.f32.mxu0 0.0
    %725 = vmatmul.mubr.f32.gmra.mrb[0].mxu0 %v601
    %v726 = vpop.f32.mrb[0].mxu0
    %v727 = vadd.f32 0.0, %v726
    %v728 = vpop.f32.mrb[0].mxu0
    %729 = vmatprep.mubr.f32.mxu0 0.0
    %730 = vmatmul.mubr.f32.gmra.mrb[0].mxu0 %v604
    %v731 = vpop.f32.mrb[0].mxu0
    %v732 = vadd.f32 0.0, %v731
    %v733 = vpop.f32.mrb[0].mxu0
    %734 = vmatprep.mubr.f32.mxu0 0.0
    %735 = vmatmul.mubr.f32.gmra.mrb[0].mxu0 %v607
    %v736 = vpop.f32.mrb[0].mxu0
    %v737 = vadd.f32 0.0, %v736
    %v738 = vpop.f32.mrb[0].mxu0
    %739 = vmatprep.mubr.f32.mxu0 0.0
    %740 = vmatmul.mubr.f32.gmra.mrb[0].mxu0 %v610
    %v741 = vpop.f32.mrb[0].mxu0
    %v742 = vadd.f32 0.0, %v741
    %v743 = vpop.f32.mrb[0].mxu0
    %744 = vmatprep.mubr.f32.mxu0 0.0
    %745 = vmatmul.mubr.f32.gmra.mrb[0].mxu0 %v613
    %v746 = vpop.f32.mrb[0].mxu0
    %v747 = vadd.f32 0.0, %v746
    %v748 = vpop.f32.mrb[0].mxu0
    %749 = vmatprep.mubr.f32.mxu0 0.0
    %750 = vmatmul.mubr.f32.gmra.mrb[0].mxu0 %v616
    %v751 = vpop.f32.mrb[0].mxu0
    %v752 = vadd.f32 0.0, %v751
    %v753 = vpop.f32.mrb[0].mxu0
    %754 = vmatprep.mubr.f32.mxu0 0.0
    %755 = vmatmul.mubr.f32.gmra.mrb[0].mxu0 %v619
    %v756 = vpop.f32.mrb[0].mxu0
    %v757 = vadd.f32 0.0, %v756
    %v758 = vpop.f32.mrb[0].mxu0
    %759 = vmatprep.mubr.f32.mxu0 0.0
    %760 = vmatmul.mubr.f32.gmra.mrb[0].mxu0 %v622
    %v761 = vpop.f32.mrb[0].mxu0
    %v762 = vadd.f32 0.0, %v761
    %v763 = vpop.f32.mrb[0].mxu0
    %764 = vmatprep.mubr.f32.mxu0 0.0
    %765 = vmatmul.mubr.f32.gmra.mrb[0].mxu0 %v625
    %v766 = vpop.f32.mrb[0].mxu0
    %v767 = vadd.f32 0.0, %v766
    %v768 = vpop.f32.mrb[0].mxu0
    %769 = vmatprep.mubr.f32.mxu0 0.0
    %770 = vmatmul.mubr.f32.gmra.mrb[0].mxu0 %v628
    %v771 = vpop.f32.mrb[0].mxu0
    %v772 = vadd.f32 0.0, %v771
    %v773 = vpop.f32.mrb[0].mxu0
    %774 = vmatprep.mubr.f32.mxu0 0.0
    %775 = vmatmul.mubr.f32.gmra.mrb[0].mxu0 %v631
    %v776 = vpop.f32.mrb[0].mxu0
    %v777 = vadd.f32 0.0, %v776
    %v778 = vpop.f32.mrb[0].mxu0
    %779 = vmatprep.mubr.f32.mxu0 0.0
    %780 = vmatmul.mubr.f32.gmra.mrb[0].mxu0 %v634
    %v781 = vpop.f32.mrb[0].mxu0
    %v782 = vadd.f32 0.0, %v781
    %v783 = vpop.f32.mrb[0].mxu0
    %784 = vdwg.mxu0
    %v785 = vld [vmem:[%s5] sm:$0xf]
    %786 = vrot.lane.b32.xlu0 %v508, 124
    %v787 = vpop.permute.xlu0 %786
    %788 = vrot.lane.b32.xlu0 %v513, 124
    %v789 = vpop.permute.xlu0 %788
    %790 = vrot.lane.b32.xlu0 %v518, 124
    %v791 = vpop.permute.xlu0 %790
    %792 = vrot.lane.b32.xlu0 %v523, 124
    %v793 = vpop.permute.xlu0 %792
    %794 = vrot.lane.b32.xlu0 %v528, 124
    %v795 = vpop.permute.xlu0 %794
    %796 = vrot.lane.b32.xlu0 %v533, 124
    %v797 = vpop.permute.xlu0 %796
    %798 = vrot.lane.b32.xlu0 %v538, 124
    %v799 = vpop.permute.xlu0 %798
    %800 = vrot.lane.b32.xlu0 %v543, 124
    %v801 = vpop.permute.xlu0 %800
    %802 = vrot.lane.b32.xlu0 %v548, 124
    %v803 = vpop.permute.xlu0 %802
    %804 = vrot.lane.b32.xlu0 %v553, 124
    %v805 = vpop.permute.xlu0 %804
    %806 = vrot.lane.b32.xlu0 %v558, 124
    %v807 = vpop.permute.xlu0 %806
    %808 = vrot.lane.b32.xlu0 %v563, 124
    %v809 = vpop.permute.xlu0 %808
    %810 = vrot.lane.b32.xlu0 %v568, 124
    %v811 = vpop.permute.xlu0 %810
    %812 = vrot.lane.b32.xlu0 %v573, 124
    %v813 = vpop.permute.xlu0 %812
    %814 = vrot.lane.b32.xlu0 %v578, 124
    %v815 = vpop.permute.xlu0 %814
    %816 = vrot.lane.b32.xlu0 %v583, 124
    %v817 = vpop.permute.xlu0 %816
    %v818 = vsel %vm587, %v787, 0
    %v820 = vsel %vm587, %v789, 0
    %v822 = vsel %vm587, %v791, 0
    %v824 = vsel %vm587, %v793, 0
    %v826 = vsel %vm587, %v795, 0
    %v828 = vsel %vm587, %v797, 0
    %v830 = vsel %vm587, %v799, 0
    %v832 = vsel %vm587, %v801, 0
    %v834 = vsel %vm587, %v803, 0
    %v836 = vsel %vm587, %v805, 0
    %v838 = vsel %vm587, %v807, 0
    %v840 = vsel %vm587, %v809, 0
    %v842 = vsel %vm587, %v811, 0
    %v844 = vsel %vm587, %v813, 0
    %v846 = vsel %vm587, %v815, 0
    %v848 = vsel %vm587, %v817, 0
    %v851 = vsel %vm636, %v785, 0
    %853 = vmatprep.subr.mxu0 0.0
    %854 = vmatpush1.msra.mxu0 %v851
    %855 = vmatprep.subr.mxu0 0.0
    %856 = vmatpush1.msra.mxu0 0.0
    %857 = vmatprep.subr.mxu0 0.0
    %858 = vmatpush1.msra.mxu0 0.0
    %859 = vmatprep.subr.mxu0 0.0
    %860 = vmatpush1.msra.mxu0 0.0
    %861 = vmatprep.subr.mxu0 0.0
    %862 = vmatpush1.msra.mxu0 0.0
    %863 = vmatprep.subr.mxu0 0.0
    %864 = vmatpush1.msra.mxu0 0.0
    %865 = vmatprep.subr.mxu0 0.0
    %866 = vmatpush1.msra.mxu0 0.0
    %867 = vmatprep.subr.mxu0 0.0
    %868 = vmatpush1.msra.mxu0 0.0
    %869 = vmatprep.subr.mxu0 0.0
    %870 = vmatpush1.msra.mxu0 0.0
    %871 = vmatprep.subr.mxu0 0.0
    %872 = vmatpush1.msra.mxu0 0.0
    %873 = vmatprep.subr.mxu0 0.0
    %874 = vmatpush1.msra.mxu0 0.0
    %875 = vmatprep.subr.mxu0 0.0
    %876 = vmatpush1.msra.mxu0 0.0
    %877 = vmatprep.subr.mxu0 0.0
    %878 = vmatpush1.msra.mxu0 0.0
    %879 = vmatprep.subr.mxu0 0.0
    %880 = vmatpush1.msra.mxu0 0.0
    %881 = vmatprep.subr.mxu0 0.0
    %882 = vmatpush1.msra.mxu0 0.0
    %883 = vmatprep.subr.mxu0 0.0
    %884 = vmatpush1.msra.mxu0 0.0
    %885 = vmatprep.subr.mxu0 0.0
    %886 = vmatpush1.msra.mxu0 0.0
    %887 = vmatprep.subr.mxu0 0.0
    %888 = vmatpush1.msra.mxu0 0.0
    %889 = vmatprep.subr.mxu0 0.0
    %890 = vmatpush1.msra.mxu0 0.0
    %891 = vmatprep.subr.mxu0 0.0
    %892 = vmatpush1.msra.mxu0 0.0
    %893 = vmatprep.subr.mxu0 0.0
    %894 = vmatpush1.msra.mxu0 0.0
    %895 = vmatprep.subr.mxu0 0.0
    %896 = vmatpush1.msra.mxu0 0.0
    %897 = vmatprep.subr.mxu0 0.0
    %898 = vmatpush1.msra.mxu0 0.0
    %899 = vmatprep.subr.mxu0 0.0
    %900 = vmatpush1.msra.mxu0 0.0
    %901 = vmatprep.subr.mxu0 0.0
    %902 = vmatpush1.msra.mxu0 0.0
    %903 = vmatprep.subr.mxu0 0.0
    %904 = vmatpush1.msra.mxu0 0.0
    %905 = vmatprep.subr.mxu0 0.0
    %906 = vmatpush1.msra.mxu0 0.0
    %907 = vmatprep.subr.mxu0 0.0
    %908 = vmatpush1.msra.mxu0 0.0
    %909 = vmatprep.subr.mxu0 0.0
    %910 = vmatpush1.msra.mxu0 0.0
    %911 = vmatprep.subr.mxu0 0.0
    %912 = vmatpush1.msra.mxu0 0.0
    %913 = vmatprep.subr.mxu0 0.0
    %914 = vmatpush1.msra.mxu0 0.0
    %915 = vmatprep.subr.mxu0 0.0
    %916 = vmatpush1.msra.mxu0 0.0
    %917 = vmatprep.mubr.f32.mxu0 0.0
    %918 = vmatmul.mubr.f32.gmra.mrb[0].mxu0 %v818
    %v919 = vpop.f32.mrb[0].mxu0
    %v920 = vadd.f32 0.0, %v919
    %v921 = vpop.f32.mrb[0].mxu0
    %922 = vmatprep.mubr.f32.mxu0 0.0
    %923 = vmatmul.mubr.f32.gmra.mrb[0].mxu0 %v820
    %v924 = vpop.f32.mrb[0].mxu0
    %v925 = vadd.f32 0.0, %v924
    %v926 = vpop.f32.mrb[0].mxu0
    %927 = vmatprep.mubr.f32.mxu0 0.0
    %928 = vmatmul.mubr.f32.gmra.mrb[0].mxu0 %v822
    %v929 = vpop.f32.mrb[0].mxu0
    %v930 = vadd.f32 0.0, %v929
    %v931 = vpop.f32.mrb[0].mxu0
    %932 = vmatprep.mubr.f32.mxu0 0.0
    %933 = vmatmul.mubr.f32.gmra.mrb[0].mxu0 %v824
    %v934 = vpop.f32.mrb[0].mxu0
    %v935 = vadd.f32 0.0, %v934
    %v936 = vpop.f32.mrb[0].mxu0
    %937 = vmatprep.mubr.f32.mxu0 0.0
    %938 = vmatmul.mubr.f32.gmra.mrb[0].mxu0 %v826
    %v939 = vpop.f32.mrb[0].mxu0
    %v940 = vadd.f32 0.0, %v939
    %v941 = vpop.f32.mrb[0].mxu0
    %942 = vmatprep.mubr.f32.mxu0 0.0
    %943 = vmatmul.mubr.f32.gmra.mrb[0].mxu0 %v828
    %v944 = vpop.f32.mrb[0].mxu0
    %v945 = vadd.f32 0.0, %v944
    %v946 = vpop.f32.mrb[0].mxu0
    %947 = vmatprep.mubr.f32.mxu0 0.0
    %948 = vmatmul.mubr.f32.gmra.mrb[0].mxu0 %v830
    %v949 = vpop.f32.mrb[0].mxu0
    %v950 = vadd.f32 0.0, %v949
    %v951 = vpop.f32.mrb[0].mxu0
    %952 = vmatprep.mubr.f32.mxu0 0.0
    %953 = vmatmul.mubr.f32.gmra.mrb[0].mxu0 %v832
    %v954 = vpop.f32.mrb[0].mxu0
    %v955 = vadd.f32 0.0, %v954
    %v956 = vpop.f32.mrb[0].mxu0
    %957 = vmatprep.mubr.f32.mxu0 0.0
    %958 = vmatmul.mubr.f32.gmra.mrb[0].mxu0 %v834
    %v959 = vpop.f32.mrb[0].mxu0
    %v960 = vadd.f32 0.0, %v959
    %v961 = vpop.f32.mrb[0].mxu0
    %962 = vmatprep.mubr.f32.mxu0 0.0
    %963 = vmatmul.mubr.f32.gmra.mrb[0].mxu0 %v836
    %v964 = vpop.f32.mrb[0].mxu0
    %v965 = vadd.f32 0.0, %v964
    %v966 = vpop.f32.mrb[0].mxu0
    %967 = vmatprep.mubr.f32.mxu0 0.0
    %968 = vmatmul.mubr.f32.gmra.mrb[0].mxu0 %v838
    %v969 = vpop.f32.mrb[0].mxu0
    %v970 = vadd.f32 0.0, %v969
    %v971 = vpop.f32.mrb[0].mxu0
    %972 = vmatprep.mubr.f32.mxu0 0.0
    %973 = vmatmul.mubr.f32.gmra.mrb[0].mxu0 %v840
    %v974 = vpop.f32.mrb[0].mxu0
    %v975 = vadd.f32 0.0, %v974
    %v976 = vpop.f32.mrb[0].mxu0
    %977 = vmatprep.mubr.f32.mxu0 0.0
    %978 = vmatmul.mubr.f32.gmra.mrb[0].mxu0 %v842
    %v979 = vpop.f32.mrb[0].mxu0
    %v980 = vadd.f32 0.0, %v979
    %v981 = vpop.f32.mrb[0].mxu0
    %982 = vmatprep.mubr.f32.mxu0 0.0
    %983 = vmatmul.mubr.f32.gmra.mrb[0].mxu0 %v844
    %v984 = vpop.f32.mrb[0].mxu0
    %v985 = vadd.f32 0.0, %v984
    %v986 = vpop.f32.mrb[0].mxu0
    %987 = vmatprep.mubr.f32.mxu0 0.0
    %988 = vmatmul.mubr.f32.gmra.mrb[0].mxu0 %v846
    %v989 = vpop.f32.mrb[0].mxu0
    %v990 = vadd.f32 0.0, %v989
    %v991 = vpop.f32.mrb[0].mxu0
    %992 = vmatprep.mubr.f32.mxu0 0.0
    %993 = vmatmul.mubr.f32.gmra.mrb[0].mxu0 %v848
    %v994 = vpop.f32.mrb[0].mxu0
    %v995 = vadd.f32 0.0, %v994
    %v996 = vpop.f32.mrb[0].mxu0
    %997 = vdwg.mxu0
    %v998 = vadd.f32 %v186, %v707
    %v999 = vadd.f32 %v192, %v712
    %v1000 = vadd.f32 %v198, %v717
    %v1001 = vadd.f32 %v204, %v722
    %v1002 = vadd.f32 %v210, %v727
    %v1003 = vadd.f32 %v216, %v732
    %v1004 = vadd.f32 %v222, %v737
    %v1005 = vadd.f32 %v228, %v742
    %v1006 = vadd.f32 %v234, %v747
    %v1007 = vadd.f32 %v240, %v752
    %v1008 = vadd.f32 %v246, %v757
    %v1009 = vadd.f32 %v252, %v762
    %v1010 = vadd.f32 %v258, %v767
    %v1011 = vadd.f32 %v264, %v772
    %v1012 = vadd.f32 %v270, %v777
    %v1013 = vadd.f32 %v276, %v782
    %1014 = vst [vmem:[#allocation5] sm:$0xff] %v998
    %1015 = vst [vmem:[#allocation5 + $0x18] sm:$0xff] %v999
    %1016 = vst [vmem:[#allocation5 + $0x30] sm:$0xff] %v1000
    %1017 = vst [vmem:[#allocation5 + $0x48] sm:$0xff] %v1001
    %1018 = vst [vmem:[#allocation5 + $0x60] sm:$0xff] %v1002
    %1019 = vst [vmem:[#allocation5 + $0x78] sm:$0xff] %v1003
    %1020 = vst [vmem:[#allocation5 + $0x90] sm:$0xff] %v1004
    %1021 = vst [vmem:[#allocation5 + $0xa8] sm:$0xff] %v1005
    %1022 = vst [vmem:[#allocation5 + $0xc0] sm:$0xff] %v1006
    %1023 = vst [vmem:[#allocation5 + $0xd8] sm:$0xff] %v1007
    %1024 = vst [vmem:[#allocation5 + $0xf0] sm:$0xff] %v1008
    %1025 = vst [vmem:[#allocation5 + $0x108] sm:$0xff] %v1009
    %1026 = vst [vmem:[#allocation5 + $0x120] sm:$0xff] %v1010
    %1027 = vst [vmem:[#allocation5 + $0x138] sm:$0xff] %v1011
    %1028 = vst [vmem:[#allocation5 + $0x150] sm:$0xff] %v1012
    %1029 = vst [vmem:[#allocation5 + $0x168] sm:$0xff] %v1013
    %1030 = vst [vmem:[#allocation5 + $0x8] sm:$0xff] %v188
    %1031 = vst [vmem:[#allocation5 + $0x20] sm:$0xff] %v194
    %1032 = vst [vmem:[#allocation5 + $0x38] sm:$0xff] %v200
    %1033 = vst [vmem:[#allocation5 + $0x50] sm:$0xff] %v206
    %1034 = vst [vmem:[#allocation5 + $0x68] sm:$0xff] %v212
    %1035 = vst [vmem:[#allocation5 + $0x80] sm:$0xff] %v218
    %1036 = vst [vmem:[#allocation5 + $0x98] sm:$0xff] %v224
    %1037 = vst [vmem:[#allocation5 + $0xb0] sm:$0xff] %v230
    %1038 = vst [vmem:[#allocation5 + $0xc8] sm:$0xff] %v236
    %1039 = vst [vmem:[#allocation5 + $0xe0] sm:$0xff] %v242
    %1040 = vst [vmem:[#allocation5 + $0xf8] sm:$0xff] %v248
    %1041 = vst [vmem:[#allocation5 + $0x110] sm:$0xff] %v254
    %1042 = vst [vmem:[#allocation5 + $0x128] sm:$0xff] %v260
    %1043 = vst [vmem:[#allocation5 + $0x140] sm:$0xff] %v266
    %1044 = vst [vmem:[#allocation5 + $0x158] sm:$0xff] %v272
    %1045 = vst [vmem:[#allocation5 + $0x170] sm:$0xff] %v278
    %v1046 = vadd.f32 %v347, %v920
    %v1047 = vadd.f32 %v352, %v925
    %v1048 = vadd.f32 %v357, %v930
    %v1049 = vadd.f32 %v362, %v935
    %v1050 = vadd.f32 %v367, %v940
    %v1051 = vadd.f32 %v372, %v945
    %v1052 = vadd.f32 %v377, %v950
    %v1053 = vadd.f32 %v382, %v955
    %v1054 = vadd.f32 %v387, %v960
    %v1055 = vadd.f32 %v392, %v965
    %v1056 = vadd.f32 %v397, %v970
    %v1057 = vadd.f32 %v402, %v975
    %v1058 = vadd.f32 %v407, %v980
    %v1059 = vadd.f32 %v412, %v985
    %v1060 = vadd.f32 %v417, %v990
    %v1061 = vadd.f32 %v422, %v995
    %1062 = vst [vmem:[#allocation5 + $0x10] sm:$0xff] %v1046
    %1063 = vst [vmem:[#allocation5 + $0x28] sm:$0xff] %v1047
    %1064 = vst [vmem:[#allocation5 + $0x40] sm:$0xff] %v1048
    %1065 = vst [vmem:[#allocation5 + $0x58] sm:$0xff] %v1049
    %1066 = vst [vmem:[#allocation5 + $0x70] sm:$0xff] %v1050
    %1067 = vst [vmem:[#allocation5 + $0x88] sm:$0xff] %v1051
    %1068 = vst [vmem:[#allocation5 + $0xa0] sm:$0xff] %v1052
    %1069 = vst [vmem:[#allocation5 + $0xb8] sm:$0xff] %v1053
    %1070 = vst [vmem:[#allocation5 + $0xd0] sm:$0xff] %v1054
    %1071 = vst [vmem:[#allocation5 + $0xe8] sm:$0xff] %v1055
    %1072 = vst [vmem:[#allocation5 + $0x100] sm:$0xff] %v1056
    %1073 = vst [vmem:[#allocation5 + $0x118] sm:$0xff] %v1057
    %1074 = vst [vmem:[#allocation5 + $0x130] sm:$0xff] %v1058
    %1075 = vst [vmem:[#allocation5 + $0x148] sm:$0xff] %v1059
    %1076 = vst [vmem:[#allocation5 + $0x160] sm:$0xff] %v1060
    %1077 = vst [vmem:[#allocation5 + $0x178] sm:$0xff] %v1061
    // Predicated region
    $region30: #{lora_qkv_forward.1} parent=1 // pred_check
      _
    $region31: #{lora_qkv_forward.1} parent=1 // pred_check_branch
      %1079 = sbr.rel (0) target = $region33
    $region32: #{lora_qkv_forward.1} parent=1 // pred_region
      %s1081 = ssub.s32 6144, 6144
      %1082 = vsyncadd [#allocation4], %s1081
      %s1083 = sshll.u32 [#allocation5], 4
      %s1084 = int_to_ptr.vmem [resolvable:$true] %s1083
      %1089 = dma.vmem_to_hbm [thread:$0]  %s1084, 6144, %s6, [#allocation4], 384, 384, 24
    $region33: #{lora_qkv_forward.1} parent=1 // pred_fallthru
      _
    // Predicated region
    $region34: #{lora_qkv_forward.1} parent=1 // pred_check
      _
    $region35: #{lora_qkv_forward.1} parent=1 // pred_check_branch
      %1091 = sbr.rel (0) target = $region37
    $region36: #{lora_qkv_forward.1} parent=1 // pred_region
      %1092 = dma.done [#allocation4], 6144
    $region37: #{lora_qkv_forward.1} parent=1 // pred_fallthru
      _
    %1093 = vsyncpa [#allocation3], 1
    %1094 = vsyncpa [#allocation4], 1

</llo_original>
